<compile_context>
chip_gen: v6e
topology: v6e:2x2x1
jax: 0.10.0
libtpu: 0.0.40
codegen_flags: <defaults>
</compile_context>

<pallas_src>
import functools

import jax
import jax.numpy as jnp
from jax import lax
from jax.experimental import pallas as pl
from jax.experimental.pallas import tpu as pltpu


def _round_up(x, m):
    return ((x + m - 1) // m) * m


def _vmem_physical_bytes():
    try:
        info = pltpu.get_tpu_info()
        cap = getattr(info, "vmem_capacity_bytes", None)
        if cap:
            return int(cap)
    except Exception:
        pass
    return 128 * 2**20


def _supcon_dualt_kernel(lab_row_ref, cnt_row_ref, lab_col_ref, anchor_ref, featT_ref,
                         out_ref, *, tile_rows, inv_pos, inv_neg):
    """One [tile_rows, N_pad] strip of the dual-temperature SupCon loss.

    lab_row_ref : [TR, 1]        int32  labels of this anchor-row tile (-1 = pad)
    cnt_row_ref : [TR, 1]        f32    per-row positive-pair counts (0 = pad / no pos)
    lab_col_ref : [1, N_pad]     int32  labels of every contrast column (-1 = pad)
    anchor_ref  : [TR, D_pad]    bf16   anchor tile (pipelined)
    featT_ref   : [D_pad, N_pad] bf16   full contrast matrix, pre-transposed, resident
    out_ref     : [1, 1, 128]    f32    per-tile partial sum of mean_log_prob_pos
    """
    i = pl.program_id(0)
    r0 = pl.multiple_of(i * tile_rows, tile_rows)

    # Canonical [M,K]@[K,N] matmul straight onto the MXU, f32 accumulation.
    sim = lax.dot_general(anchor_ref[...], featT_ref[...],
                          dimension_numbers=(((1,), (0,)), ((), ())),
                          preferred_element_type=jnp.float32)        # [TR, N_pad]

    n_pad = sim.shape[1]
    lab_row = lab_row_ref[...]                                       # [TR, 1]
    lab_col = lab_col_ref[...]                                       # [1, N_pad]

    col_valid = lab_col >= 0                                         # pad cols labelled -1
    row_ids = r0 + lax.broadcasted_iota(jnp.int32, (tile_rows, 1), 0)
    col_ids = lax.broadcasted_iota(jnp.int32, (1, n_pad), 1)
    logits_mask = jnp.logical_and(row_ids != col_ids, col_valid)     # drop self + pads
    pos_mask = jnp.logical_and(lab_row == lab_col, logits_mask)      # positives (no self)

    # Dual temperatures: one select over two fused multiplies (no float masks).
    adc = jnp.where(pos_mask, sim * inv_pos, sim * inv_neg)

    # Stable LSE: shift by the max over the *denominator* columns so the denominator
    # always contains exp(0) = 1 and never underflows to 0.
    row_max = jnp.max(jnp.where(logits_mask, adc, -jnp.inf), axis=1, keepdims=True)
    logits = adc - row_max
    denom = jnp.sum(jnp.exp(jnp.where(logits_mask, logits, -jnp.inf)),
                    axis=1, keepdims=True)                            # [TR, 1]
    log_denom = jnp.log(denom)

    # sum_j m*log_prob == sum_j m*logits - (sum_j m) * log(Z): never form log_prob.
    sum_pos_logits = jnp.sum(jnp.where(pos_mask, logits, 0.0),
                             axis=1, keepdims=True)                   # [TR, 1]

    pos_count = cnt_row_ref[...]                                      # [TR, 1] (precomputed)
    row_valid = pos_count > 0.0                                       # pads & pos-less rows
    safe_count = jnp.where(row_valid, pos_count, 1.0)
    mean_log_prob_pos = (sum_pos_logits - pos_count * log_denom) / safe_count
    contrib = jnp.where(row_valid, mean_log_prob_pos, 0.0)

    partial = jnp.sum(contrib, axis=0, keepdims=True)                 # [1, 1]
    out_ref[...] = jnp.broadcast_to(partial.reshape(1, 1, 1), (1, 1, 128))


def supcon_loss_dual_t(features, labels=None, mask=None,
                       temperature_pos=0.07, contrast_mode='all',
                       pos_neg_ratio=10, compute_dtype=jnp.bfloat16,
                       tile_rows=None):
    """JAX/Pallas port of SupConLossDualT.forward (contrast_mode 'all' or 'one')."""
    temperature_neg = temperature_pos / pos_neg_ratio
    inv_pos = 1.0 / float(temperature_pos)
    inv_neg = 1.0 / float(temperature_neg)

    if features.ndim < 3:
        raise ValueError('`features` needs to be [bsz, n_views, ...]')
    if features.ndim > 3:
        features = features.reshape(features.shape[0], features.shape[1], -1)
    bsz, n_views, dim = features.shape

    if labels is not None and mask is not None:
        raise ValueError('Cannot define both `labels` and `mask`')
    if mask is not None:
        # TODO(synk): an explicit (possibly asymmetric) [bsz, bsz] mask would need a
        # dense row-tiled mask input; only the SimCLR (eye) and `labels` paths are
        # implemented in-kernel.
        raise NotImplementedError('explicit `mask` path not implemented in the Pallas kernel')
    if labels is None:
        base_labels = jnp.arange(bsz, dtype=jnp.int32)          # eye(bsz) mask
    else:
        base_labels = jnp.asarray(labels).reshape(-1).astype(jnp.int32)
        if base_labels.shape[0] != bsz:
            raise ValueError('Num of labels does not match num of features')

    if contrast_mode == 'one':
        anchor_count = 1
    elif contrast_mode == 'all':
        anchor_count = n_views
    else:
        raise ValueError(f'Unknown mode: {contrast_mode}')

    n_contrast = n_views * bsz
    n_anchor = anchor_count * bsz

    # torch.cat(torch.unbind(features, dim=1), dim=0) == transpose + reshape
    # (view-major: rows [v*bsz + b] = features[b, v]).
    contrast_feature = (jnp.transpose(features, (1, 0, 2))
                        .reshape(n_contrast, dim).astype(compute_dtype))
    anchor_feature = contrast_feature[:n_anchor]    # 'all': all rows; 'one': view-0 rows

    if tile_rows is None:
        # 256 matches the 256-wide v6e/v7x MXU; clamp for tiny inputs.
        # TODO(synk): on v5e (128-wide MXU) tile_rows=128 is marginally better.
        tile_rows = min(256, _round_up(max(n_anchor, 1), 128))

    d_pad = _round_up(dim, 128)
    n_pad = _round_up(n_contrast, 128)
    num_tiles = pl.cdiv(n_anchor, tile_rows)
    n_anchor_pad = num_tiles * tile_rows

    # Contrast matrix pre-transposed once (in HBM) to [D_pad, N_pad] so the MXU sees a
    # canonical [M,K]@[K,N] matmul; zero padding contributes nothing.
    featT = jnp.zeros((d_pad, n_pad), dtype=compute_dtype)
    featT = featT.at[:dim, :n_contrast].set(contrast_feature.T)
    anchors = jnp.zeros((n_anchor_pad, d_pad), dtype=compute_dtype)
    anchors = anchors.at[:n_anchor, :dim].set(anchor_feature)

    tiled_labels = jnp.tile(base_labels, n_views)                       # [N]
    col_labels = jnp.full((1, n_pad), -1, dtype=jnp.int32)
    col_labels = col_labels.at[0, :n_contrast].set(tiled_labels)
    row_labels = jnp.full((n_anchor_pad, 1), -1, dtype=jnp.int32)
    row_labels = row_labels.at[:n_anchor, 0].set(tiled_labels[:n_anchor])

    # Per-row positive counts = n_views * freq(label) - 1 (self), computed once in XLA
    # with O(bsz^2) work instead of an O(TR*N) reduction per grid step.
    # NOTE: rows with zero positives contribute 0 (the PyTorch reference yields NaN).
    base_freq = jnp.sum(base_labels[:, None] == base_labels[None, :], axis=1)
    row_counts = (n_views * base_freq - 1).astype(jnp.float32)          # [bsz]
    anchor_row_counts = jnp.tile(row_counts, anchor_count)              # [n_anchor]
    pos_counts = jnp.zeros((n_anchor_pad, 1), dtype=jnp.float32)
    pos_counts = pos_counts.at[:n_anchor, 0].set(anchor_row_counts)

    kernel = functools.partial(
        _supcon_dualt_kernel, tile_rows=tile_rows, inv_pos=inv_pos, inv_neg=inv_neg)

    # VMEM budget: single-buffered resident contrast^T + double-buffered anchor tiles
    # + a handful of live [TR, N_pad] f32 strips; cap at 85% of physical VMEM so Mosaic
    # keeps headroom (v7x: ~54 of 64 MiB; v5e/v6e: ~109 of 128 MiB).
    itemsize = jnp.dtype(compute_dtype).itemsize
    featT_bytes = d_pad * n_pad * itemsize
    anchor_bytes = 2 * tile_rows * d_pad * itemsize
    strip_bytes = tile_rows * n_pad * 4
    small_bytes = 2 * n_pad * 4 + 8 * tile_rows * 4 + (1 << 20)
    req = featT_bytes + anchor_bytes + 8 * strip_bytes + small_bytes
    vmem_limit = int(min(int(0.85 * _vmem_physical_bytes()), max(32 * 2**20, req)))

    cost = pl.CostEstimate(
        flops=int(2 * n_anchor_pad * n_pad * d_pad + 16 * n_anchor_pad * n_pad),
        transcendentals=int(n_anchor_pad * n_pad + 2 * n_anchor_pad),
        bytes_accessed=int(featT.size * itemsize + anchors.size * itemsize
                           + (col_labels.size + row_labels.size) * 4
                           + pos_counts.size * 4 + num_tiles * 128 * 4))

    partials = pl.pallas_call(
        kernel,
        grid=(num_tiles,),
        in_specs=[
            pl.BlockSpec((tile_rows, 1), lambda i: (i, 0)),       # anchor-row labels
            pl.BlockSpec((tile_rows, 1), lambda i: (i, 0)),       # anchor-row pos counts
            pl.BlockSpec((1, n_pad), lambda i: (0, 0),            # column labels (resident)
                         pipeline_mode=pl.Buffered(1)),
            pl.BlockSpec((tile_rows, d_pad), lambda i: (i, 0)),   # anchor tile (pipelined)
            pl.BlockSpec((d_pad, n_pad), lambda i: (0, 0),        # contrast^T (resident)
                         pipeline_mode=pl.Buffered(1)),
        ],
        out_specs=pl.BlockSpec((1, 1, 128), lambda i: (i, 0, 0)),
        out_shape=jax.ShapeDtypeStruct((num_tiles, 1, 128), jnp.float32),
        compiler_params=pltpu.CompilerParams(
            dimension_semantics=("parallel",),
            vmem_limit_bytes=vmem_limit),
        cost_estimate=cost,
    )(row_labels, pos_counts, col_labels, anchors, featT)

    # Tiny final reduction outside the kernel keeps the grid axis parallel
    # (so v7x can shard row tiles across both TensorCores).
    return -jnp.sum(partials[:, 0, 0]) / jnp.float32(n_anchor)


def _reference_loss(features, labels=None, temperature_pos=0.07,
                    contrast_mode='all', pos_neg_ratio=10):
    """Pure-JAX literal translation of the PyTorch forward (f32)."""
    t_pos = temperature_pos
    t_neg = temperature_pos / pos_neg_ratio
    bsz, n_views, dim = features.shape
    if labels is None:
        base_mask = jnp.eye(bsz, dtype=jnp.float32)
    else:
        labels = jnp.asarray(labels).reshape(-1, 1)
        base_mask = (labels == labels.T).astype(jnp.float32)
    contrast = jnp.transpose(features, (1, 0, 2)).reshape(n_views * bsz, dim)
    contrast = contrast.astype(jnp.float32)
    if contrast_mode == 'one':
        anchor, anchor_count = contrast[:bsz], 1
    else:
        anchor, anchor_count = contrast, n_views
    mask = jnp.tile(base_mask, (anchor_count, n_views))
    sim = anchor @ contrast.T
    adc = sim / t_neg + mask * (sim / t_pos - sim / t_neg)
    logits = adc - jnp.max(adc, axis=1, keepdims=True)
    na = anchor_count * bsz
    logits_mask = jnp.ones_like(mask).at[jnp.arange(na), jnp.arange(na)].set(0.0)
    mask = mask * logits_mask
    exp_logits = jnp.exp(logits) * logits_mask
    log_prob = logits - jnp.log(jnp.sum(exp_logits, axis=1, keepdims=True))
    mean_log_prob_pos = jnp.sum(mask * log_prob, axis=1) / jnp.sum(mask, axis=1)
    return jnp.mean(-mean_log_prob_pos)


if __name__ == "__main__":
    key = jax.random.PRNGKey(0)
    bsz, n_views, dim = 8, 2, 32
    feats = jax.random.normal(key, (bsz, n_views, dim), dtype=jnp.float32)
    # L2-normalize embeddings (standard input for SupCon-style losses)
    feats = feats / jnp.linalg.norm(feats, axis=-1, keepdims=True)

    # Reference consumes the same bf16-quantized features the kernel's MXU sees.
    feats_q = feats.astype(jnp.bfloat16).astype(jnp.float32)

    # 1) default SimCLR-style (labels=None, mask=None), contrast_mode='all'
    loss = supcon_loss_dual_t(feats, temperature_pos=0.07, pos_neg_ratio=10)
    loss = jax.block_until_ready(loss)
    ref = _reference_loss(feats_q, temperature_pos=0.07, pos_neg_ratio=10)
    assert jnp.allclose(loss, ref, rtol=2e-3, atol=2e-3), (loss, ref)

    # 2) supervised (labels) path
    labels = jnp.array([0, 1, 2, 3, 0, 1, 2, 3], dtype=jnp.int32)
    loss_l = jax.block_until_ready(
        supcon_loss_dual_t(feats, labels=labels, temperature_pos=0.07, pos_neg_ratio=10))
    ref_l = _reference_loss(feats_q, labels=labels, temperature_pos=0.07, pos_neg_ratio=10)
    assert jnp.allclose(loss_l, ref_l, rtol=2e-3, atol=2e-3), (loss_l, ref_l)

    # 3) contrast_mode='one'
    loss_o = jax.block_until_ready(
        supcon_loss_dual_t(feats, temperature_pos=0.07, contrast_mode='one',
                           pos_neg_ratio=10))
    ref_o = _reference_loss(feats_q, temperature_pos=0.07, contrast_mode='one',
                            pos_neg_ratio=10)
    assert jnp.allclose(loss_o, ref_o, rtol=2e-3, atol=2e-3), (loss_o, ref_o)

    print("KERNEL_OK")
</pallas_src>

<mosaic_0001>
module attributes {stable_mosaic.version = 11 : i64} {
  func.func @_supcon_dualt_kernel(%arg0: i32, %arg1: memref<128x1xi32, #tpu.memory_space<vmem>>, %arg2: memref<128x1xf32, #tpu.memory_space<vmem>>, %arg3: memref<1x128xi32, #tpu.memory_space<vmem>>, %arg4: memref<128x128xbf16, #tpu.memory_space<vmem>>, %arg5: memref<128x128xbf16, #tpu.memory_space<vmem>>, %arg6: memref<1x1x128xf32, #tpu.memory_space<vmem>>) attributes {dimension_semantics = [#tpu.dimension_semantics<parallel>], iteration_bounds = array<i64: 1>, scalar_prefetch = 0 : i64, scratch_operands = 0 : i64, tpu.core_type = #tpu.core_type<tc>, window_params = [{transform_indices = @transform_0, window_bounds = array<i64: 128, 1>}, {transform_indices = @transform_1, window_bounds = array<i64: 128, 1>}, {pipeline_mode = #tpu.pipeline_mode<synchronous>, transform_indices = @transform_2, window_bounds = array<i64: 1, 128>}, {transform_indices = @transform_3, window_bounds = array<i64: 128, 128>}, {pipeline_mode = #tpu.pipeline_mode<synchronous>, transform_indices = @transform_4, window_bounds = array<i64: 128, 128>}, {transform_indices = @transform_5, window_bounds = array<i64: 1, 1, 128>}]} {
    %c128_i32 = arith.constant 128 : i32
    %0 = arith.muli %arg0, %c128_i32 : i32
    %1 = tpu.assume_multiple %0, 128 : i32
    %c0 = arith.constant 0 : index
    %c0_0 = arith.constant 0 : index
    %2 = vector.load %arg4[%c0, %c0_0] : memref<128x128xbf16, #tpu.memory_space<vmem>>, vector<128x128xbf16>
    %c0_1 = arith.constant 0 : index
    %c0_2 = arith.constant 0 : index
    %3 = vector.load %arg5[%c0_1, %c0_2] : memref<128x128xbf16, #tpu.memory_space<vmem>>, vector<128x128xbf16>
    %cst = arith.constant dense<0.000000e+00> : vector<128x128xf32>
    %4 = tpu.matmul %2, %3, %cst {dimension_numbers = #tpu.dot_dimension_numbers<[1], [0], [0], [1], [0, 0, 1, 1], [], []>} : vector<128x128xbf16>, vector<128x128xbf16>, vector<128x128xf32> -> vector<128x128xf32>
    %c0_3 = arith.constant 0 : index
    %c0_4 = arith.constant 0 : index
    %5 = vector.load %arg1[%c0_3, %c0_4] : memref<128x1xi32, #tpu.memory_space<vmem>>, vector<128x1xi32>
    %c0_5 = arith.constant 0 : index
    %c0_6 = arith.constant 0 : index
    %6 = vector.load %arg3[%c0_5, %c0_6] : memref<1x128xi32, #tpu.memory_space<vmem>>, vector<1x128xi32>
    %c0_i32 = arith.constant 0 : i32
    %7 = vector.broadcast %c0_i32 : i32 to vector<1x128xi32>
    %8 = arith.cmpi sge, %6, %7 : vector<1x128xi32>
    %9 = tpu.iota {dimensions = array<i32: 0>} : vector<128x1xi32>
    %10 = vector.broadcast %1 : i32 to vector<128x1xi32>
    %11 = arith.addi %10, %9 : vector<128x1xi32>
    %12 = tpu.iota {dimensions = array<i32: 1>} : vector<1x128xi32>
    %13 = vector.broadcast %11 : vector<128x1xi32> to vector<128x128xi32>
    %14 = vector.broadcast %12 : vector<1x128xi32> to vector<128x128xi32>
    %15 = arith.cmpi ne, %13, %14 : vector<128x128xi32>
    %16 = vector.broadcast %8 : vector<1x128xi1> to vector<128x128xi1>
    %17 = arith.andi %15, %16 : vector<128x128xi1>
    %18 = vector.broadcast %5 : vector<128x1xi32> to vector<128x128xi32>
    %19 = vector.broadcast %6 : vector<1x128xi32> to vector<128x128xi32>
    %20 = arith.cmpi eq, %18, %19 : vector<128x128xi32>
    %21 = arith.andi %20, %17 : vector<128x128xi1>
    %cst_7 = arith.constant 14.2857141 : f32
    %22 = vector.broadcast %cst_7 : f32 to vector<128x128xf32>
    %23 = arith.mulf %4, %22 : vector<128x128xf32>
    %cst_8 = arith.constant 142.857147 : f32
    %24 = vector.broadcast %cst_8 : f32 to vector<128x128xf32>
    %25 = arith.mulf %4, %24 : vector<128x128xf32>
    %26 = arith.select %21, %23, %25 : vector<128x128xi1>, vector<128x128xf32>
    %cst_9 = arith.constant 0xFF800000 : f32
    %27 = vector.broadcast %cst_9 : f32 to vector<128x128xf32>
    %28 = arith.select %17, %26, %27 : vector<128x128xi1>, vector<128x128xf32>
    %cst_10 = arith.constant dense<0xFF800000> : vector<128xf32>
    %29 = vector.multi_reduction <maximumf>, %28, %cst_10 [1] : vector<128x128xf32> to vector<128xf32>
    %30 = vector.shape_cast %29 : vector<128xf32> to vector<128x1xf32>
    %31 = vector.broadcast %30 : vector<128x1xf32> to vector<128x128xf32>
    %32 = arith.subf %26, %31 : vector<128x128xf32>
    %cst_11 = arith.constant 0xFF800000 : f32
    %33 = vector.broadcast %cst_11 : f32 to vector<128x128xf32>
    %34 = arith.select %17, %32, %33 : vector<128x128xi1>, vector<128x128xf32>
    %35 = math.exp %34 : vector<128x128xf32>
    %cst_12 = arith.constant dense<0.000000e+00> : vector<128xf32>
    %36 = vector.multi_reduction <add>, %35, %cst_12 [1] : vector<128x128xf32> to vector<128xf32>
    %37 = vector.shape_cast %36 : vector<128xf32> to vector<128x1xf32>
    %38 = math.log %37 : vector<128x1xf32>
    %cst_13 = arith.constant 0.000000e+00 : f32
    %39 = vector.broadcast %cst_13 : f32 to vector<128x128xf32>
    %40 = arith.select %21, %32, %39 : vector<128x128xi1>, vector<128x128xf32>
    %cst_14 = arith.constant dense<0.000000e+00> : vector<128xf32>
    %41 = vector.multi_reduction <add>, %40, %cst_14 [1] : vector<128x128xf32> to vector<128xf32>
    %42 = vector.shape_cast %41 : vector<128xf32> to vector<128x1xf32>
    %c0_15 = arith.constant 0 : index
    %c0_16 = arith.constant 0 : index
    %43 = vector.load %arg2[%c0_15, %c0_16] : memref<128x1xf32, #tpu.memory_space<vmem>>, vector<128x1xf32>
    %cst_17 = arith.constant 0.000000e+00 : f32
    %44 = vector.broadcast %cst_17 : f32 to vector<128x1xf32>
    %45 = arith.cmpf ogt, %43, %44 : vector<128x1xf32>
    %cst_18 = arith.constant 1.000000e+00 : f32
    %46 = vector.broadcast %cst_18 : f32 to vector<128x1xf32>
    %47 = arith.select %45, %43, %46 : vector<128x1xi1>, vector<128x1xf32>
    %48 = arith.mulf %43, %38 : vector<128x1xf32>
    %49 = arith.subf %42, %48 : vector<128x1xf32>
    %50 = arith.divf %49, %47 : vector<128x1xf32>
    %cst_19 = arith.constant 0.000000e+00 : f32
    %51 = vector.broadcast %cst_19 : f32 to vector<128x1xf32>
    %52 = arith.select %45, %50, %51 : vector<128x1xi1>, vector<128x1xf32>
    %cst_20 = arith.constant dense<0.000000e+00> : vector<1xf32>
    %53 = vector.multi_reduction <add>, %52, %cst_20 [0] : vector<128x1xf32> to vector<1xf32>
    %54 = vector.shape_cast %53 : vector<1xf32> to vector<1x1xf32>
    %55 = vector.shape_cast %54 : vector<1x1xf32> to vector<1x1x1xf32>
    %56 = vector.shape_cast %55 : vector<1x1x1xf32> to vector<1x1x1xf32>
    %57 = vector.broadcast %56 : vector<1x1x1xf32> to vector<1x1x128xf32>
    %c0_21 = arith.constant 0 : index
    %c0_22 = arith.constant 0 : index
    %c0_23 = arith.constant 0 : index
    %58 = vector.load %arg6[%c0_21, %c0_22, %c0_23] : memref<1x1x128xf32, #tpu.memory_space<vmem>>, vector<1x1x128xf32>
    tpu.vector_store %arg6[%c0_21, %c0_22, %c0_23], %57 {strides = array<i32>} : memref<1x1x128xf32, #tpu.memory_space<vmem>>, vector<1x1x128xf32>,
    return
  }
  func.func @transform_0(%arg0: i32) -> (i32, i32) {
    %c0_i32 = arith.constant 0 : i32
    %c0_i32_0 = arith.constant 0 : i32
    return %arg0, %c0_i32 : i32, i32
  }
  func.func @transform_1(%arg0: i32) -> (i32, i32) {
    %c0_i32 = arith.constant 0 : i32
    %c0_i32_0 = arith.constant 0 : i32
    return %arg0, %c0_i32 : i32, i32
  }
  func.func @transform_2(%arg0: i32) -> (i32, i32) {
    %c0_i32 = arith.constant 0 : i32
    %c0_i32_0 = arith.constant 0 : i32
    %c0_i32_1 = arith.constant 0 : i32
    return %c0_i32, %c0_i32_0 : i32, i32
  }
  func.func @transform_3(%arg0: i32) -> (i32, i32) {
    %c0_i32 = arith.constant 0 : i32
    %c0_i32_0 = arith.constant 0 : i32
    return %arg0, %c0_i32 : i32, i32
  }
  func.func @transform_4(%arg0: i32) -> (i32, i32) {
    %c0_i32 = arith.constant 0 : i32
    %c0_i32_0 = arith.constant 0 : i32
    %c0_i32_1 = arith.constant 0 : i32
    return %c0_i32, %c0_i32_0 : i32, i32
  }
  func.func @transform_5(%arg0: i32) -> (i32, i32, i32) {
    %c0_i32 = arith.constant 0 : i32
    %c0_i32_0 = arith.constant 0 : i32
    %c0_i32_1 = arith.constant 0 : i32
    return %arg0, %c0_i32, %c0_i32_0 : i32, i32, i32
  }
}

</mosaic_0001>

<llo_original>
// kernel: tpu_custom_call.1
$region0: #{tpu_custom_call.1}
  #allocation0 [shape = 'u32[]', space=smem, size = 0x4, offset = 0x4, fixed_abs, tag = 'smem constant byte address 0x4 - core index']
  #allocation1 [shape = 'u32[144,128]{1,0:T(1,128)}', space=vmem, size = 0x12000, scoped, tag = 'internal scratch']
  %s0 = inlined_call_operand.vmem [shape: s32[128,1], index: 0, kind: input, shape index: {}]
  %s1 = inlined_call_operand.vmem [shape: f32[128,1], index: 1, kind: input, shape index: {}]
  %s2 = inlined_call_operand.vmem [shape: s32[1,128], index: 2, kind: input, shape index: {}]
  %s3 = inlined_call_operand.vmem [shape: bf16[128,128], index: 3, kind: input, shape index: {}]
  %s4 = inlined_call_operand.vmem [shape: bf16[128,128], index: 4, kind: input, shape index: {}]
  %s5 = inlined_call_operand.hbm [shape: f32[1,1,128], index: 5, kind: output, shape index: {}]
  %s6 = sld [smem:[#allocation0]]
  $region30: #{tpu_custom_call.1} parent=0
    _
  %s8 = ssub.s32 1, %s6
  %s9 = scalar_select 0, %s8, %s6
  $region1: #{tpu_custom_call.1} parent=0
    #allocation2 [shape = 'u8[512]{0}', space=vmem, size = 0x400, scoped, tag = 'output window, operand 0, single buffered']
    #allocation3 [shape = 's32[1]{0}', space=sflag, size = 0x4, scoped, tag = 'scoped memory for tpu_custom_call.1']
    %10 = vsyncpa [#allocation3], 0
    // Predicated region
    $region2: #{tpu_custom_call.1} parent=1 // pred_check
      _
    $region3: #{tpu_custom_call.1} parent=1 // pred_check_branch
      %12 = sbr.rel (0) target = $region5
    $region4: #{tpu_custom_call.1} parent=1 // pred_region
      _
    $region5: #{tpu_custom_call.1} parent=1 // pred_fallthru
      _
    // Predicated region
    $region6: #{tpu_custom_call.1} parent=1 // pred_check
      _
    $region7: #{tpu_custom_call.1} parent=1 // pred_check_branch
      %14 = sbr.rel (0) target = $region9
    $region8: #{tpu_custom_call.1} parent=1 // pred_region
      _
    $region9: #{tpu_custom_call.1} parent=1 // pred_fallthru
      _
    // Predicated region
    $region10: #{tpu_custom_call.1} parent=1 // pred_check
      _
    $region11: #{tpu_custom_call.1} parent=1 // pred_check_branch
      %16 = sbr.rel (0) target = $region13
    $region12: #{tpu_custom_call.1} parent=1 // pred_region
      _
    $region13: #{tpu_custom_call.1} parent=1 // pred_fallthru
      _
    // Predicated region
    $region14: #{tpu_custom_call.1} parent=1 // pred_check
      _
    $region15: #{tpu_custom_call.1} parent=1 // pred_check_branch
      %18 = sbr.rel (0) target = $region17
    $region16: #{tpu_custom_call.1} parent=1 // pred_region
      _
    $region17: #{tpu_custom_call.1} parent=1 // pred_fallthru
      _
    // Predicated region
    $region18: #{tpu_custom_call.1} parent=1 // pred_check
      _
    $region19: #{tpu_custom_call.1} parent=1 // pred_check_branch
      %20 = sbr.rel (0) target = $region21
    $region20: #{tpu_custom_call.1} parent=1 // pred_region
      _
    $region21: #{tpu_custom_call.1} parent=1 // pred_fallthru
      _
    %s22 = smul.u32 0, 128
    %v23 = vld [vmem:[%s3] sm:$0xf]
    %v24 = vld [vmem:[%s3 + $0x4] sm:$0xf]
    %v25 = vld [vmem:[%s3 + $0x8] sm:$0xf]
    %v26 = vld [vmem:[%s3 + $0xc] sm:$0xf]
    %v27 = vld [vmem:[%s3 + $0x10] sm:$0xf]
    %v28 = vld [vmem:[%s3 + $0x14] sm:$0xf]
    %v29 = vld [vmem:[%s3 + $0x18] sm:$0xf]
    %v30 = vld [vmem:[%s3 + $0x1c] sm:$0xf]
    %v31 = vld [vmem:[%s3 + $0x20] sm:$0xf]
    %v32 = vld [vmem:[%s3 + $0x24] sm:$0xf]
    %v33 = vld [vmem:[%s3 + $0x28] sm:$0xf]
    %v34 = vld [vmem:[%s3 + $0x2c] sm:$0xf]
    %v35 = vld [vmem:[%s3 + $0x30] sm:$0xf]
    %v36 = vld [vmem:[%s3 + $0x34] sm:$0xf]
    %v37 = vld [vmem:[%s3 + $0x38] sm:$0xf]
    %v38 = vld [vmem:[%s3 + $0x3c] sm:$0xf]
    %v39 = vld [vmem:[%s4] sm:$0xf]
    %v40 = vld [vmem:[%s4 + $0x4] sm:$0xf]
    %v41 = vld [vmem:[%s4 + $0x8] sm:$0xf]
    %v42 = vld [vmem:[%s4 + $0xc] sm:$0xf]
    %v43 = vld [vmem:[%s4 + $0x10] sm:$0xf]
    %v44 = vld [vmem:[%s4 + $0x14] sm:$0xf]
    %v45 = vld [vmem:[%s4 + $0x18] sm:$0xf]
    %v46 = vld [vmem:[%s4 + $0x1c] sm:$0xf]
    %v47 = vld [vmem:[%s4 + $0x20] sm:$0xf]
    %v48 = vld [vmem:[%s4 + $0x24] sm:$0xf]
    %v49 = vld [vmem:[%s4 + $0x28] sm:$0xf]
    %v50 = vld [vmem:[%s4 + $0x2c] sm:$0xf]
    %v51 = vld [vmem:[%s4 + $0x30] sm:$0xf]
    %v52 = vld [vmem:[%s4 + $0x34] sm:$0xf]
    %v53 = vld [vmem:[%s4 + $0x38] sm:$0xf]
    %v54 = vld [vmem:[%s4 + $0x3c] sm:$0xf]
    %v71 = vunpack.c.l.b16 %v23
    %v72 = vunpack.c.l.b16 %v24
    %v73 = vunpack.c.l.b16 %v25
    %v74 = vunpack.c.l.b16 %v26
    %v75 = vunpack.c.l.b16 %v27
    %v76 = vunpack.c.l.b16 %v28
    %v77 = vunpack.c.l.b16 %v29
    %v78 = vunpack.c.l.b16 %v30
    %v79 = vunpack.c.l.b16 %v31
    %v80 = vunpack.c.l.b16 %v32
    %v81 = vunpack.c.l.b16 %v33
    %v82 = vunpack.c.l.b16 %v34
    %v83 = vunpack.c.l.b16 %v35
    %v84 = vunpack.c.l.b16 %v36
    %v85 = vunpack.c.l.b16 %v37
    %v86 = vunpack.c.l.b16 %v38
    %v87 = vpack.c.b16 %v72, %v71
    %v88 = vpack.c.b16 %v74, %v73
    %v89 = vpack.c.b16 %v76, %v75
    %v90 = vpack.c.b16 %v78, %v77
    %v91 = vpack.c.b16 %v80, %v79
    %v92 = vpack.c.b16 %v82, %v81
    %v93 = vpack.c.b16 %v84, %v83
    %v94 = vpack.c.b16 %v86, %v85
    %v119 = vunpack.c.l.b16 %v39
    %v120 = vunpack.c.l.b16 %v40
    %v121 = vunpack.c.l.b16 %v41
    %v122 = vunpack.c.l.b16 %v42
    %v123 = vunpack.c.l.b16 %v43
    %v124 = vunpack.c.l.b16 %v44
    %v125 = vunpack.c.l.b16 %v45
    %v126 = vunpack.c.l.b16 %v46
    %v127 = vunpack.c.l.b16 %v47
    %v128 = vunpack.c.l.b16 %v48
    %v129 = vunpack.c.l.b16 %v49
    %v130 = vunpack.c.l.b16 %v50
    %v131 = vunpack.c.l.b16 %v51
    %v132 = vunpack.c.l.b16 %v52
    %v133 = vunpack.c.l.b16 %v53
    %v134 = vunpack.c.l.b16 %v54
    %v135 = vpack.c.b16 %v120, %v119
    %v136 = vpack.c.b16 %v122, %v121
    %v137 = vpack.c.b16 %v124, %v123
    %v138 = vpack.c.b16 %v126, %v125
    %v139 = vpack.c.b16 %v128, %v127
    %v140 = vpack.c.b16 %v130, %v129
    %v141 = vpack.c.b16 %v132, %v131
    %v142 = vpack.c.b16 %v134, %v133
    %151 = vmatprep.subr.bf16.mxu0 0
    %152 = vmatpush1.bf16.msra.mxu0 %v142
    %153 = vmatprep.subr.bf16.mxu0 0
    %154 = vmatpush1.bf16.msra.mxu0 %v141
    %155 = vmatprep.subr.bf16.mxu0 0
    %156 = vmatpush1.bf16.msra.mxu0 %v140
    %157 = vmatprep.subr.bf16.mxu0 0
    %158 = vmatpush1.bf16.msra.mxu0 %v139
    %159 = vmatprep.subr.bf16.mxu0 0
    %160 = vmatpush1.bf16.msra.mxu0 %v138
    %161 = vmatprep.subr.bf16.mxu0 0
    %162 = vmatpush1.bf16.msra.mxu0 %v137
    %163 = vmatprep.subr.bf16.mxu0 0
    %164 = vmatpush1.bf16.msra.mxu0 %v136
    %165 = vmatprep.subr.bf16.mxu0 0
    %166 = vmatpush1.bf16.msra.mxu0 %v135
    %167 = vmatprep.subr.bf16.mxu0 0
    %168 = vmatpush2.bf16.msra.mxu0 0
    %169 = vmatprep.subr.bf16.mxu0 0
    %170 = vmatpush2.bf16.msra.mxu0 0
    %171 = vmatprep.subr.bf16.mxu0 0
    %172 = vmatpush2.bf16.msra.mxu0 0
    %173 = vmatprep.subr.bf16.mxu0 0
    %174 = vmatpush2.bf16.msra.mxu0 0
    %175 = vmatprep.subr.bf16.mxu0 0
    %176 = vmatpush2.bf16.msra.mxu0 0
    %177 = vmatprep.subr.bf16.mxu0 0
    %178 = vmatpush2.bf16.msra.mxu0 0
    %179 = vmatprep.subr.bf16.mxu0 0
    %180 = vmatpush2.bf16.msra.mxu0 0
    %181 = vmatprep.subr.bf16.mxu0 0
    %182 = vmatpush2.bf16.msra.mxu0 0
    %183 = vmatprep.mubr.bf16.mxu0 0
    %184 = vmatmul.mubr.bf16.gmra.mxu0 %v87
    %v185 = vpop.f32.mrf.mxu0
    %v186 = vadd.f32 0.0, %v185
    %v187 = vpop.f32.mrf.mxu0
    %v188 = vpop.f32.mrf.mxu0
    %v189 = vadd.f32 0.0, %v188
    %v190 = vpop.f32.mrf.mxu0
    %191 = vmatprep.mubr.bf16.mxu0 0
    %192 = vmatmul.mubr.bf16.gmra.mxu0 %v88
    %v193 = vpop.f32.mrf.mxu0
    %v194 = vadd.f32 0.0, %v193
    %v195 = vpop.f32.mrf.mxu0
    %v196 = vpop.f32.mrf.mxu0
    %v197 = vadd.f32 0.0, %v196
    %v198 = vpop.f32.mrf.mxu0
    %199 = vmatprep.mubr.bf16.mxu0 0
    %200 = vmatmul.mubr.bf16.gmra.mxu0 %v89
    %v201 = vpop.f32.mrf.mxu0
    %v202 = vadd.f32 0.0, %v201
    %v203 = vpop.f32.mrf.mxu0
    %v204 = vpop.f32.mrf.mxu0
    %v205 = vadd.f32 0.0, %v204
    %v206 = vpop.f32.mrf.mxu0
    %207 = vmatprep.mubr.bf16.mxu0 0
    %208 = vmatmul.mubr.bf16.gmra.mxu0 %v90
    %v209 = vpop.f32.mrf.mxu0
    %v210 = vadd.f32 0.0, %v209
    %v211 = vpop.f32.mrf.mxu0
    %v212 = vpop.f32.mrf.mxu0
    %v213 = vadd.f32 0.0, %v212
    %v214 = vpop.f32.mrf.mxu0
    %215 = vmatprep.mubr.bf16.mxu0 0
    %216 = vmatmul.mubr.bf16.gmra.mxu0 %v91
    %v217 = vpop.f32.mrf.mxu0
    %v218 = vadd.f32 0.0, %v217
    %v219 = vpop.f32.mrf.mxu0
    %v220 = vpop.f32.mrf.mxu0
    %v221 = vadd.f32 0.0, %v220
    %v222 = vpop.f32.mrf.mxu0
    %223 = vmatprep.mubr.bf16.mxu0 0
    %224 = vmatmul.mubr.bf16.gmra.mxu0 %v92
    %v225 = vpop.f32.mrf.mxu0
    %v226 = vadd.f32 0.0, %v225
    %v227 = vpop.f32.mrf.mxu0
    %v228 = vpop.f32.mrf.mxu0
    %v229 = vadd.f32 0.0, %v228
    %v230 = vpop.f32.mrf.mxu0
    %231 = vmatprep.mubr.bf16.mxu0 0
    %232 = vmatmul.mubr.bf16.gmra.mxu0 %v93
    %v233 = vpop.f32.mrf.mxu0
    %v234 = vadd.f32 0.0, %v233
    %v235 = vpop.f32.mrf.mxu0
    %v236 = vpop.f32.mrf.mxu0
    %v237 = vadd.f32 0.0, %v236
    %v238 = vpop.f32.mrf.mxu0
    %239 = vmatprep.mubr.bf16.mxu0 0
    %240 = vmatmul.mubr.bf16.gmra.mxu0 %v94
    %v241 = vpop.f32.mrf.mxu0
    %v242 = vadd.f32 0.0, %v241
    %v243 = vpop.f32.mrf.mxu0
    %v244 = vpop.f32.mrf.mxu0
    %v245 = vadd.f32 0.0, %v244
    %v246 = vpop.f32.mrf.mxu0
    %247 = vdwg.mxu0
    %v248 = vld [vmem:[%s0] sm:$0xff]
    %v249 = vld [vmem:[%s0 + $0x8] sm:$0xff]
    %v250 = vld [vmem:[%s0 + $0x10] sm:$0xff]
    %v251 = vld [vmem:[%s0 + $0x18] sm:$0xff]
    %v252 = vld [vmem:[%s0 + $0x20] sm:$0xff]
    %v253 = vld [vmem:[%s0 + $0x28] sm:$0xff]
    %v254 = vld [vmem:[%s0 + $0x30] sm:$0xff]
    %v255 = vld [vmem:[%s0 + $0x38] sm:$0xff]
    %v256 = vld [vmem:[%s0 + $0x40] sm:$0xff]
    %v257 = vld [vmem:[%s0 + $0x48] sm:$0xff]
    %v258 = vld [vmem:[%s0 + $0x50] sm:$0xff]
    %v259 = vld [vmem:[%s0 + $0x58] sm:$0xff]
    %v260 = vld [vmem:[%s0 + $0x60] sm:$0xff]
    %v261 = vld [vmem:[%s0 + $0x68] sm:$0xff]
    %v262 = vld [vmem:[%s0 + $0x70] sm:$0xff]
    %v263 = vld [vmem:[%s0 + $0x78] sm:$0xff]
    %v264 = vld [vmem:[%s2] sm:$0x1]
    %vm265 = vcmp.ge.s32.totalorder %v264, 0
    %v266 = vlaneseq
    %v267 = vshrl.u32 %v266, 7
    %v268 = vadd.s32 %v267, 8
    %v269 = vadd.s32 %v267, 16
    %v270 = vadd.s32 %v267, 24
    %v271 = vadd.s32 %v267, 32
    %v272 = vadd.s32 %v267, 40
    %v273 = vadd.s32 %v267, 48
    %v274 = vadd.s32 %v267, 56
    %v275 = vadd.s32 %v267, 64
    %v276 = vadd.s32 %v267, 72
    %v277 = vadd.s32 %v267, 80
    %v278 = vadd.s32 %v267, 88
    %v279 = vadd.s32 %v267, 96
    %v280 = vadd.s32 %v267, 104
    %v281 = vadd.s32 %v267, 112
    %v282 = vadd.s32 %v267, 120
    %v283 = vstv %s22
    %v284 = vadd.s32 %v283, %v267
    %v285 = vadd.s32 %v283, %v268
    %v286 = vadd.s32 %v283, %v269
    %v287 = vadd.s32 %v283, %v270
    %v288 = vadd.s32 %v283, %v271
    %v289 = vadd.s32 %v283, %v272
    %v290 = vadd.s32 %v283, %v273
    %v291 = vadd.s32 %v283, %v274
    %v292 = vadd.s32 %v283, %v275
    %v293 = vadd.s32 %v283, %v276
    %v294 = vadd.s32 %v283, %v277
    %v295 = vadd.s32 %v283, %v278
    %v296 = vadd.s32 %v283, %v279
    %v297 = vadd.s32 %v283, %v280
    %v298 = vadd.s32 %v283, %v281
    %v299 = vadd.s32 %v283, %v282
    %v300 = vlaneseq
    %v301 = vand.u32 %v300, 127
    %vm302 = vcmp.ne.s32.totalorder %v284, %v301
    %vm303 = vcmp.ne.s32.totalorder %v285, %v301
    %vm304 = vcmp.ne.s32.totalorder %v286, %v301
    %vm305 = vcmp.ne.s32.totalorder %v287, %v301
    %vm306 = vcmp.ne.s32.totalorder %v288, %v301
    %vm307 = vcmp.ne.s32.totalorder %v289, %v301
    %vm308 = vcmp.ne.s32.totalorder %v290, %v301
    %vm309 = vcmp.ne.s32.totalorder %v291, %v301
    %vm310 = vcmp.ne.s32.totalorder %v292, %v301
    %vm311 = vcmp.ne.s32.totalorder %v293, %v301
    %vm312 = vcmp.ne.s32.totalorder %v294, %v301
    %vm313 = vcmp.ne.s32.totalorder %v295, %v301
    %vm314 = vcmp.ne.s32.totalorder %v296, %v301
    %vm315 = vcmp.ne.s32.totalorder %v297, %v301
    %vm316 = vcmp.ne.s32.totalorder %v298, %v301
    %vm317 = vcmp.ne.s32.totalorder %v299, %v301
    %v318 = vsel %vm265, 1, 0
    %v319 = vlaneseq
    %v320 = vshrl.u32 %v319, 7
    %v321 = vsub.s32 0, %v320
    %v322 = vrot.slane %v318, %v321
    %vm323 = vcmp.eq.s32.totalorder %v322, 1
    %vm324 = vmand %vm302, %vm323
    %vm325 = vmand %vm303, %vm323
    %vm326 = vmand %vm304, %vm323
    %vm327 = vmand %vm305, %vm323
    %vm328 = vmand %vm306, %vm323
    %vm329 = vmand %vm307, %vm323
    %vm330 = vmand %vm308, %vm323
    %vm331 = vmand %vm309, %vm323
    %vm332 = vmand %vm310, %vm323
    %vm333 = vmand %vm311, %vm323
    %vm334 = vmand %vm312, %vm323
    %vm335 = vmand %vm313, %vm323
    %vm336 = vmand %vm314, %vm323
    %vm337 = vmand %vm315, %vm323
    %vm338 = vmand %vm316, %vm323
    %vm339 = vmand %vm317, %vm323
    %340 = vset.pattern.permute.xlu0 0
    %341 = vperm.xlu0 %340, %v248
    %v342 = vpop.permute.xlu0 %341
    %343 = vset.pattern.permute.xlu0 0
    %344 = vperm.xlu0 %343, %v249
    %v345 = vpop.permute.xlu0 %344
    %346 = vset.pattern.permute.xlu0 0
    %347 = vperm.xlu0 %346, %v250
    %v348 = vpop.permute.xlu0 %347
    %349 = vset.pattern.permute.xlu0 0
    %350 = vperm.xlu0 %349, %v251
    %v351 = vpop.permute.xlu0 %350
    %352 = vset.pattern.permute.xlu0 0
    %353 = vperm.xlu0 %352, %v252
    %v354 = vpop.permute.xlu0 %353
    %355 = vset.pattern.permute.xlu0 0
    %356 = vperm.xlu0 %355, %v253
    %v357 = vpop.permute.xlu0 %356
    %358 = vset.pattern.permute.xlu0 0
    %359 = vperm.xlu0 %358, %v254
    %v360 = vpop.permute.xlu0 %359
    %361 = vset.pattern.permute.xlu0 0
    %362 = vperm.xlu0 %361, %v255
    %v363 = vpop.permute.xlu0 %362
    %364 = vset.pattern.permute.xlu0 0
    %365 = vperm.xlu0 %364, %v256
    %v366 = vpop.permute.xlu0 %365
    %367 = vset.pattern.permute.xlu0 0
    %368 = vperm.xlu0 %367, %v257
    %v369 = vpop.permute.xlu0 %368
    %370 = vset.pattern.permute.xlu0 0
    %371 = vperm.xlu0 %370, %v258
    %v372 = vpop.permute.xlu0 %371
    %373 = vset.pattern.permute.xlu0 0
    %374 = vperm.xlu0 %373, %v259
    %v375 = vpop.permute.xlu0 %374
    %376 = vset.pattern.permute.xlu0 0
    %377 = vperm.xlu0 %376, %v260
    %v378 = vpop.permute.xlu0 %377
    %379 = vset.pattern.permute.xlu0 0
    %380 = vperm.xlu0 %379, %v261
    %v381 = vpop.permute.xlu0 %380
    %382 = vset.pattern.permute.xlu0 0
    %383 = vperm.xlu0 %382, %v262
    %v384 = vpop.permute.xlu0 %383
    %385 = vset.pattern.permute.xlu0 0
    %386 = vperm.xlu0 %385, %v263
    %v387 = vpop.permute.xlu0 %386
    %v388 = vlaneseq
    %v389 = vshrl.u32 %v388, 7
    %v390 = vsub.s32 0, %v389
    %v391 = vrot.slane %v264, %v390
    %vm392 = vcmp.eq.s32.totalorder %v342, %v391
    %vm393 = vcmp.eq.s32.totalorder %v345, %v391
    %vm394 = vcmp.eq.s32.totalorder %v348, %v391
    %vm395 = vcmp.eq.s32.totalorder %v351, %v391
    %vm396 = vcmp.eq.s32.totalorder %v354, %v391
    %vm397 = vcmp.eq.s32.totalorder %v357, %v391
    %vm398 = vcmp.eq.s32.totalorder %v360, %v391
    %vm399 = vcmp.eq.s32.totalorder %v363, %v391
    %vm400 = vcmp.eq.s32.totalorder %v366, %v391
    %vm401 = vcmp.eq.s32.totalorder %v369, %v391
    %vm402 = vcmp.eq.s32.totalorder %v372, %v391
    %vm403 = vcmp.eq.s32.totalorder %v375, %v391
    %vm404 = vcmp.eq.s32.totalorder %v378, %v391
    %vm405 = vcmp.eq.s32.totalorder %v381, %v391
    %vm406 = vcmp.eq.s32.totalorder %v384, %v391
    %vm407 = vcmp.eq.s32.totalorder %v387, %v391
    %vm408 = vmand %vm392, %vm324
    %vm409 = vmand %vm393, %vm325
    %vm410 = vmand %vm394, %vm326
    %vm411 = vmand %vm395, %vm327
    %vm412 = vmand %vm396, %vm328
    %vm413 = vmand %vm397, %vm329
    %vm414 = vmand %vm398, %vm330
    %vm415 = vmand %vm399, %vm331
    %vm416 = vmand %vm400, %vm332
    %vm417 = vmand %vm401, %vm333
    %vm418 = vmand %vm402, %vm334
    %vm419 = vmand %vm403, %vm335
    %vm420 = vmand %vm404, %vm336
    %vm421 = vmand %vm405, %vm337
    %vm422 = vmand %vm406, %vm338
    %vm423 = vmand %vm407, %vm339
    %v424 = vmul.f32 %v186, 14.285714
    %v425 = vmul.f32 %v189, 14.285714
    %v426 = vmul.f32 %v194, 14.285714
    %v427 = vmul.f32 %v197, 14.285714
    %v428 = vmul.f32 %v202, 14.285714
    %v429 = vmul.f32 %v205, 14.285714
    %v430 = vmul.f32 %v210, 14.285714
    %v431 = vmul.f32 %v213, 14.285714
    %v432 = vmul.f32 %v218, 14.285714
    %v433 = vmul.f32 %v221, 14.285714
    %v434 = vmul.f32 %v226, 14.285714
    %v435 = vmul.f32 %v229, 14.285714
    %v436 = vmul.f32 %v234, 14.285714
    %v437 = vmul.f32 %v237, 14.285714
    %v438 = vmul.f32 %v242, 14.285714
    %v439 = vmul.f32 %v245, 14.285714
    %v440 = vmul.f32 %v186, 142.85715
    %v441 = vmul.f32 %v189, 142.85715
    %v442 = vmul.f32 %v194, 142.85715
    %v443 = vmul.f32 %v197, 142.85715
    %v444 = vmul.f32 %v202, 142.85715
    %v445 = vmul.f32 %v205, 142.85715
    %v446 = vmul.f32 %v210, 142.85715
    %v447 = vmul.f32 %v213, 142.85715
    %v448 = vmul.f32 %v218, 142.85715
    %v449 = vmul.f32 %v221, 142.85715
    %v450 = vmul.f32 %v226, 142.85715
    %v451 = vmul.f32 %v229, 142.85715
    %v452 = vmul.f32 %v234, 142.85715
    %v453 = vmul.f32 %v237, 142.85715
    %v454 = vmul.f32 %v242, 142.85715
    %v455 = vmul.f32 %v245, 142.85715
    %v456 = vsel %vm408, %v424, %v440
    %v457 = vsel %vm409, %v425, %v441
    %v458 = vsel %vm410, %v426, %v442
    %v459 = vsel %vm411, %v427, %v443
    %v460 = vsel %vm412, %v428, %v444
    %v461 = vsel %vm413, %v429, %v445
    %v462 = vsel %vm414, %v430, %v446
    %v463 = vsel %vm415, %v431, %v447
    %v464 = vsel %vm416, %v432, %v448
    %v465 = vsel %vm417, %v433, %v449
    %v466 = vsel %vm418, %v434, %v450
    %v467 = vsel %vm419, %v435, %v451
    %v468 = vsel %vm420, %v436, %v452
    %v469 = vsel %vm421, %v437, %v453
    %v470 = vsel %vm422, %v438, %v454
    %v471 = vsel %vm423, %v439, %v455
    %v472 = vsel %vm324, %v456, -inf
    %v473 = vsel %vm325, %v457, -inf
    %v474 = vsel %vm326, %v458, -inf
    %v475 = vsel %vm327, %v459, -inf
    %v476 = vsel %vm328, %v460, -inf
    %v477 = vsel %vm329, %v461, -inf
    %v478 = vsel %vm330, %v462, -inf
    %v479 = vsel %vm331, %v463, -inf
    %v480 = vsel %vm332, %v464, -inf
    %v481 = vsel %vm333, %v465, -inf
    %v482 = vsel %vm334, %v466, -inf
    %v483 = vsel %vm335, %v467, -inf
    %v484 = vsel %vm336, %v468, -inf
    %v485 = vsel %vm337, %v469, -inf
    %v486 = vsel %vm338, %v470, -inf
    %v487 = vsel %vm339, %v471, -inf
    %488 = vmax.xlane.f32.xlu0 %v472
    %v489 = vpop.xlane.xlu0 %488
    %490 = vmax.xlane.f32.xlu0 %v473
    %v491 = vpop.xlane.xlu0 %490
    %492 = vmax.xlane.f32.xlu0 %v474
    %v493 = vpop.xlane.xlu0 %492
    %494 = vmax.xlane.f32.xlu0 %v475
    %v495 = vpop.xlane.xlu0 %494
    %496 = vmax.xlane.f32.xlu0 %v476
    %v497 = vpop.xlane.xlu0 %496
    %498 = vmax.xlane.f32.xlu0 %v477
    %v499 = vpop.xlane.xlu0 %498
    %500 = vmax.xlane.f32.xlu0 %v478
    %v501 = vpop.xlane.xlu0 %500
    %502 = vmax.xlane.f32.xlu0 %v479
    %v503 = vpop.xlane.xlu0 %502
    %504 = vmax.xlane.f32.xlu0 %v480
    %v505 = vpop.xlane.xlu0 %504
    %506 = vmax.xlane.f32.xlu0 %v481
    %v507 = vpop.xlane.xlu0 %506
    %508 = vmax.xlane.f32.xlu0 %v482
    %v509 = vpop.xlane.xlu0 %508
    %510 = vmax.xlane.f32.xlu0 %v483
    %v511 = vpop.xlane.xlu0 %510
    %512 = vmax.xlane.f32.xlu0 %v484
    %v513 = vpop.xlane.xlu0 %512
    %514 = vmax.xlane.f32.xlu0 %v485
    %v515 = vpop.xlane.xlu0 %514
    %516 = vmax.xlane.f32.xlu0 %v486
    %v517 = vpop.xlane.xlu0 %516
    %518 = vmax.xlane.f32.xlu0 %v487
    %v519 = vpop.xlane.xlu0 %518
    %v520 = vsub.f32 %v456, %v489
    %v521 = vsub.f32 %v457, %v491
    %v522 = vsub.f32 %v458, %v493
    %v523 = vsub.f32 %v459, %v495
    %v524 = vsub.f32 %v460, %v497
    %v525 = vsub.f32 %v461, %v499
    %v526 = vsub.f32 %v462, %v501
    %v527 = vsub.f32 %v463, %v503
    %v528 = vsub.f32 %v464, %v505
    %v529 = vsub.f32 %v465, %v507
    %v530 = vsub.f32 %v466, %v509
    %v531 = vsub.f32 %v467, %v511
    %v532 = vsub.f32 %v468, %v513
    %v533 = vsub.f32 %v469, %v515
    %v534 = vsub.f32 %v470, %v517
    %v535 = vsub.f32 %v471, %v519
    %v536 = vsel %vm324, %v520, -inf
    %v537 = vsel %vm325, %v521, -inf
    %v538 = vsel %vm326, %v522, -inf
    %v539 = vsel %vm327, %v523, -inf
    %v540 = vsel %vm328, %v524, -inf
    %v541 = vsel %vm329, %v525, -inf
    %v542 = vsel %vm330, %v526, -inf
    %v543 = vsel %vm331, %v527, -inf
    %v544 = vsel %vm332, %v528, -inf
    %v545 = vsel %vm333, %v529, -inf
    %v546 = vsel %vm334, %v530, -inf
    %v547 = vsel %vm335, %v531, -inf
    %v548 = vsel %vm336, %v532, -inf
    %v549 = vsel %vm337, %v533, -inf
    %v550 = vsel %vm338, %v534, -inf
    %v551 = vsel %vm339, %v535, -inf
    %v552 = vmul.f32 %v536, 1.442695
    %v553 = vpow.pop %v552
    %v554 = vmul.f32 %v537, 1.442695
    %v555 = vpow.pop %v554
    %v556 = vmul.f32 %v538, 1.442695
    %v557 = vpow.pop %v556
    %v558 = vmul.f32 %v539, 1.442695
    %v559 = vpow.pop %v558
    %v560 = vmul.f32 %v540, 1.442695
    %v561 = vpow.pop %v560
    %v562 = vmul.f32 %v541, 1.442695
    %v563 = vpow.pop %v562
    %v564 = vmul.f32 %v542, 1.442695
    %v565 = vpow.pop %v564
    %v566 = vmul.f32 %v543, 1.442695
    %v567 = vpow.pop %v566
    %v568 = vmul.f32 %v544, 1.442695
    %v569 = vpow.pop %v568
    %v570 = vmul.f32 %v545, 1.442695
    %v571 = vpow.pop %v570
    %v572 = vmul.f32 %v546, 1.442695
    %v573 = vpow.pop %v572
    %v574 = vmul.f32 %v547, 1.442695
    %v575 = vpow.pop %v574
    %v576 = vmul.f32 %v548, 1.442695
    %v577 = vpow.pop %v576
    %v578 = vmul.f32 %v549, 1.442695
    %v579 = vpow.pop %v578
    %v580 = vmul.f32 %v550, 1.442695
    %v581 = vpow.pop %v580
    %v582 = vmul.f32 %v551, 1.442695
    %v583 = vpow.pop %v582
    %584 = vadd.xlane.f32.xlu0 %v553
    %v585 = vpop.xlane.xlu0 %584
    %586 = vadd.xlane.f32.xlu0 %v555
    %v587 = vpop.xlane.xlu0 %586
    %588 = vadd.xlane.f32.xlu0 %v557
    %v589 = vpop.xlane.xlu0 %588
    %590 = vadd.xlane.f32.xlu0 %v559
    %v591 = vpop.xlane.xlu0 %590
    %592 = vadd.xlane.f32.xlu0 %v561
    %v593 = vpop.xlane.xlu0 %592
    %594 = vadd.xlane.f32.xlu0 %v563
    %v595 = vpop.xlane.xlu0 %594
    %596 = vadd.xlane.f32.xlu0 %v565
    %v597 = vpop.xlane.xlu0 %596
    %598 = vadd.xlane.f32.xlu0 %v567
    %v599 = vpop.xlane.xlu0 %598
    %600 = vadd.xlane.f32.xlu0 %v569
    %v601 = vpop.xlane.xlu0 %600
    %602 = vadd.xlane.f32.xlu0 %v571
    %v603 = vpop.xlane.xlu0 %602
    %604 = vadd.xlane.f32.xlu0 %v573
    %v605 = vpop.xlane.xlu0 %604
    %606 = vadd.xlane.f32.xlu0 %v575
    %v607 = vpop.xlane.xlu0 %606
    %608 = vadd.xlane.f32.xlu0 %v577
    %v609 = vpop.xlane.xlu0 %608
    %610 = vadd.xlane.f32.xlu0 %v579
    %v611 = vpop.xlane.xlu0 %610
    %612 = vadd.xlane.f32.xlu0 %v581
    %v613 = vpop.xlane.xlu0 %612
    %614 = vadd.xlane.f32.xlu0 %v583
    %v615 = vpop.xlane.xlu0 %614
    %v616 = vlog2.pop %v585
    %v617 = vmul.f32 %v616, 0.6931472
    %v618 = vlog2.pop %v587
    %v619 = vmul.f32 %v618, 0.6931472
    %v620 = vlog2.pop %v589
    %v621 = vmul.f32 %v620, 0.6931472
    %v622 = vlog2.pop %v591
    %v623 = vmul.f32 %v622, 0.6931472
    %v624 = vlog2.pop %v593
    %v625 = vmul.f32 %v624, 0.6931472
    %v626 = vlog2.pop %v595
    %v627 = vmul.f32 %v626, 0.6931472
    %v628 = vlog2.pop %v597
    %v629 = vmul.f32 %v628, 0.6931472
    %v630 = vlog2.pop %v599
    %v631 = vmul.f32 %v630, 0.6931472
    %v632 = vlog2.pop %v601
    %v633 = vmul.f32 %v632, 0.6931472
    %v634 = vlog2.pop %v603
    %v635 = vmul.f32 %v634, 0.6931472
    %v636 = vlog2.pop %v605
    %v637 = vmul.f32 %v636, 0.6931472
    %v638 = vlog2.pop %v607
    %v639 = vmul.f32 %v638, 0.6931472
    %v640 = vlog2.pop %v609
    %v641 = vmul.f32 %v640, 0.6931472
    %v642 = vlog2.pop %v611
    %v643 = vmul.f32 %v642, 0.6931472
    %v644 = vlog2.pop %v613
    %v645 = vmul.f32 %v644, 0.6931472
    %v646 = vlog2.pop %v615
    %v647 = vmul.f32 %v646, 0.6931472
    %v648 = vsel %vm408, %v520, 0.0
    %v649 = vsel %vm409, %v521, 0.0
    %v650 = vsel %vm410, %v522, 0.0
    %v651 = vsel %vm411, %v523, 0.0
    %v652 = vsel %vm412, %v524, 0.0
    %v653 = vsel %vm413, %v525, 0.0
    %v654 = vsel %vm414, %v526, 0.0
    %v655 = vsel %vm415, %v527, 0.0
    %v656 = vsel %vm416, %v528, 0.0
    %v657 = vsel %vm417, %v529, 0.0
    %v658 = vsel %vm418, %v530, 0.0
    %v659 = vsel %vm419, %v531, 0.0
    %v660 = vsel %vm420, %v532, 0.0
    %v661 = vsel %vm421, %v533, 0.0
    %v662 = vsel %vm422, %v534, 0.0
    %v663 = vsel %vm423, %v535, 0.0
    %664 = vadd.xlane.f32.xlu0 %v648
    %v665 = vpop.xlane.xlu0 %664
    %666 = vadd.xlane.f32.xlu0 %v649
    %v667 = vpop.xlane.xlu0 %666
    %668 = vadd.xlane.f32.xlu0 %v650
    %v669 = vpop.xlane.xlu0 %668
    %670 = vadd.xlane.f32.xlu0 %v651
    %v671 = vpop.xlane.xlu0 %670
    %672 = vadd.xlane.f32.xlu0 %v652
    %v673 = vpop.xlane.xlu0 %672
    %674 = vadd.xlane.f32.xlu0 %v653
    %v675 = vpop.xlane.xlu0 %674
    %676 = vadd.xlane.f32.xlu0 %v654
    %v677 = vpop.xlane.xlu0 %676
    %678 = vadd.xlane.f32.xlu0 %v655
    %v679 = vpop.xlane.xlu0 %678
    %680 = vadd.xlane.f32.xlu0 %v656
    %v681 = vpop.xlane.xlu0 %680
    %682 = vadd.xlane.f32.xlu0 %v657
    %v683 = vpop.xlane.xlu0 %682
    %684 = vadd.xlane.f32.xlu0 %v658
    %v685 = vpop.xlane.xlu0 %684
    %686 = vadd.xlane.f32.xlu0 %v659
    %v687 = vpop.xlane.xlu0 %686
    %688 = vadd.xlane.f32.xlu0 %v660
    %v689 = vpop.xlane.xlu0 %688
    %690 = vadd.xlane.f32.xlu0 %v661
    %v691 = vpop.xlane.xlu0 %690
    %692 = vadd.xlane.f32.xlu0 %v662
    %v693 = vpop.xlane.xlu0 %692
    %694 = vadd.xlane.f32.xlu0 %v663
    %v695 = vpop.xlane.xlu0 %694
    %v696 = vld [vmem:[%s1] sm:$0xff]
    %v697 = vld [vmem:[%s1 + $0x8] sm:$0xff]
    %v698 = vld [vmem:[%s1 + $0x10] sm:$0xff]
    %v699 = vld [vmem:[%s1 + $0x18] sm:$0xff]
    %v700 = vld [vmem:[%s1 + $0x20] sm:$0xff]
    %v701 = vld [vmem:[%s1 + $0x28] sm:$0xff]
    %v702 = vld [vmem:[%s1 + $0x30] sm:$0xff]
    %v703 = vld [vmem:[%s1 + $0x38] sm:$0xff]
    %v704 = vld [vmem:[%s1 + $0x40] sm:$0xff]
    %v705 = vld [vmem:[%s1 + $0x48] sm:$0xff]
    %v706 = vld [vmem:[%s1 + $0x50] sm:$0xff]
    %v707 = vld [vmem:[%s1 + $0x58] sm:$0xff]
    %v708 = vld [vmem:[%s1 + $0x60] sm:$0xff]
    %v709 = vld [vmem:[%s1 + $0x68] sm:$0xff]
    %v710 = vld [vmem:[%s1 + $0x70] sm:$0xff]
    %v711 = vld [vmem:[%s1 + $0x78] sm:$0xff]
    %vm712 = vcmp.gt.f32.partialorder %v696, 0.0
    %vm713 = vcmp.gt.f32.partialorder %v697, 0.0
    %vm714 = vcmp.gt.f32.partialorder %v698, 0.0
    %vm715 = vcmp.gt.f32.partialorder %v699, 0.0
    %vm716 = vcmp.gt.f32.partialorder %v700, 0.0
    %vm717 = vcmp.gt.f32.partialorder %v701, 0.0
    %vm718 = vcmp.gt.f32.partialorder %v702, 0.0
    %vm719 = vcmp.gt.f32.partialorder %v703, 0.0
    %vm720 = vcmp.gt.f32.partialorder %v704, 0.0
    %vm721 = vcmp.gt.f32.partialorder %v705, 0.0
    %vm722 = vcmp.gt.f32.partialorder %v706, 0.0
    %vm723 = vcmp.gt.f32.partialorder %v707, 0.0
    %vm724 = vcmp.gt.f32.partialorder %v708, 0.0
    %vm725 = vcmp.gt.f32.partialorder %v709, 0.0
    %vm726 = vcmp.gt.f32.partialorder %v710, 0.0
    %vm727 = vcmp.gt.f32.partialorder %v711, 0.0
    %v728 = vsel %vm712, %v696, 1.0
    %v729 = vsel %vm713, %v697, 1.0
    %v730 = vsel %vm714, %v698, 1.0
    %v731 = vsel %vm715, %v699, 1.0
    %v732 = vsel %vm716, %v700, 1.0
    %v733 = vsel %vm717, %v701, 1.0
    %v734 = vsel %vm718, %v702, 1.0
    %v735 = vsel %vm719, %v703, 1.0
    %v736 = vsel %vm720, %v704, 1.0
    %v737 = vsel %vm721, %v705, 1.0
    %v738 = vsel %vm722, %v706, 1.0
    %v739 = vsel %vm723, %v707, 1.0
    %v740 = vsel %vm724, %v708, 1.0
    %v741 = vsel %vm725, %v709, 1.0
    %v742 = vsel %vm726, %v710, 1.0
    %v743 = vsel %vm727, %v711, 1.0
    %v744 = vmul.f32 %v696, %v617
    %v745 = vmul.f32 %v697, %v619
    %v746 = vmul.f32 %v698, %v621
    %v747 = vmul.f32 %v699, %v623
    %v748 = vmul.f32 %v700, %v625
    %v749 = vmul.f32 %v701, %v627
    %v750 = vmul.f32 %v702, %v629
    %v751 = vmul.f32 %v703, %v631
    %v752 = vmul.f32 %v704, %v633
    %v753 = vmul.f32 %v705, %v635
    %v754 = vmul.f32 %v706, %v637
    %v755 = vmul.f32 %v707, %v639
    %v756 = vmul.f32 %v708, %v641
    %v757 = vmul.f32 %v709, %v643
    %v758 = vmul.f32 %v710, %v645
    %v759 = vmul.f32 %v711, %v647
    %v760 = vsub.f32 %v665, %v744
    %v761 = vsub.f32 %v667, %v745
    %v762 = vsub.f32 %v669, %v746
    %v763 = vsub.f32 %v671, %v747
    %v764 = vsub.f32 %v673, %v748
    %v765 = vsub.f32 %v675, %v749
    %v766 = vsub.f32 %v677, %v750
    %v767 = vsub.f32 %v679, %v751
    %v768 = vsub.f32 %v681, %v752
    %v769 = vsub.f32 %v683, %v753
    %v770 = vsub.f32 %v685, %v754
    %v771 = vsub.f32 %v687, %v755
    %v772 = vsub.f32 %v689, %v756
    %v773 = vsub.f32 %v691, %v757
    %v774 = vsub.f32 %v693, %v758
    %v775 = vsub.f32 %v695, %v759
    %v776 = vrcp.pop %v728
    %v777 = vmul.f32 %v760, %v776
    %v778 = vrcp.pop %v729
    %v779 = vmul.f32 %v761, %v778
    %v780 = vrcp.pop %v730
    %v781 = vmul.f32 %v762, %v780
    %v782 = vrcp.pop %v731
    %v783 = vmul.f32 %v763, %v782
    %v784 = vrcp.pop %v732
    %v785 = vmul.f32 %v764, %v784
    %v786 = vrcp.pop %v733
    %v787 = vmul.f32 %v765, %v786
    %v788 = vrcp.pop %v734
    %v789 = vmul.f32 %v766, %v788
    %v790 = vrcp.pop %v735
    %v791 = vmul.f32 %v767, %v790
    %v792 = vrcp.pop %v736
    %v793 = vmul.f32 %v768, %v792
    %v794 = vrcp.pop %v737
    %v795 = vmul.f32 %v769, %v794
    %v796 = vrcp.pop %v738
    %v797 = vmul.f32 %v770, %v796
    %v798 = vrcp.pop %v739
    %v799 = vmul.f32 %v771, %v798
    %v800 = vrcp.pop %v740
    %v801 = vmul.f32 %v772, %v800
    %v802 = vrcp.pop %v741
    %v803 = vmul.f32 %v773, %v802
    %v804 = vrcp.pop %v742
    %v805 = vmul.f32 %v774, %v804
    %v806 = vrcp.pop %v743
    %v807 = vmul.f32 %v775, %v806
    %v808 = vsel %vm712, %v777, 0.0
    %v809 = vsel %vm713, %v779, 0.0
    %v810 = vsel %vm714, %v781, 0.0
    %v811 = vsel %vm715, %v783, 0.0
    %v812 = vsel %vm716, %v785, 0.0
    %v813 = vsel %vm717, %v787, 0.0
    %v814 = vsel %vm718, %v789, 0.0
    %v815 = vsel %vm719, %v791, 0.0
    %v816 = vsel %vm720, %v793, 0.0
    %v817 = vsel %vm721, %v795, 0.0
    %v818 = vsel %vm722, %v797, 0.0
    %v819 = vsel %vm723, %v799, 0.0
    %v820 = vsel %vm724, %v801, 0.0
    %v821 = vsel %vm725, %v803, 0.0
    %v822 = vsel %vm726, %v805, 0.0
    %v823 = vsel %vm727, %v807, 0.0
    %vm824 = vcmask 7168
    %v825 = vsel %vm824, %v808, 0.0
    %v826 = vsel %vm824, %v809, 0.0
    %v827 = vadd.f32 %v825, %v826
    %v828 = vsel %vm824, %v810, 0.0
    %v829 = vadd.f32 %v827, %v828
    %v830 = vsel %vm824, %v811, 0.0
    %v831 = vadd.f32 %v829, %v830
    %v832 = vsel %vm824, %v812, 0.0
    %v833 = vadd.f32 %v831, %v832
    %v834 = vsel %vm824, %v813, 0.0
    %v835 = vadd.f32 %v833, %v834
    %v836 = vsel %vm824, %v814, 0.0
    %v837 = vadd.f32 %v835, %v836
    %v838 = vsel %vm824, %v815, 0.0
    %v839 = vadd.f32 %v837, %v838
    %v840 = vsel %vm824, %v816, 0.0
    %v841 = vadd.f32 %v839, %v840
    %v842 = vsel %vm824, %v817, 0.0
    %v843 = vadd.f32 %v841, %v842
    %v844 = vsel %vm824, %v818, 0.0
    %v845 = vadd.f32 %v843, %v844
    %v846 = vsel %vm824, %v819, 0.0
    %v847 = vadd.f32 %v845, %v846
    %v848 = vsel %vm824, %v820, 0.0
    %v849 = vadd.f32 %v847, %v848
    %v850 = vsel %vm824, %v821, 0.0
    %v851 = vadd.f32 %v849, %v850
    %v852 = vsel %vm824, %v822, 0.0
    %v853 = vadd.f32 %v851, %v852
    %v854 = vsel %vm824, %v823, 0.0
    %v855 = vadd.f32 %v853, %v854
    %v856 = vrot.slane %v855, 4
    %v857 = vadd.f32 %v855, %v856
    %v858 = vrot.slane %v857, 2
    %v859 = vadd.f32 %v857, %v858
    %v860 = vrot.slane %v859, 1
    %v861 = vadd.f32 %v859, %v860
    %863 = vset.pattern.permute.xlu0 0
    %864 = vperm.xlu0 %863, %v861
    %v865 = vpop.permute.xlu0 %864
    %867 = vst [vmem:[#allocation2] sm:$0x1] %v865
    // Predicated region
    $region22: #{tpu_custom_call.1} parent=1 // pred_check
      _
    $region23: #{tpu_custom_call.1} parent=1 // pred_check_branch
      %869 = sbr.rel (0) target = $region25
    $region24: #{tpu_custom_call.1} parent=1 // pred_region
      %s871 = ssub.s32 16, 16
      %872 = vsyncadd [#allocation3], %s871
      %s874 = sshll.u32 [#allocation2], 4
      %s875 = int_to_ptr.vmem [resolvable:$true] %s874
      %877 = dma.vmem_to_hbm [thread:$0]  %s875, 16, %s5, [#allocation3]
    $region25: #{tpu_custom_call.1} parent=1 // pred_fallthru
      _
    // Predicated region
    $region26: #{tpu_custom_call.1} parent=1 // pred_check
      _
    $region27: #{tpu_custom_call.1} parent=1 // pred_check_branch
      %879 = sbr.rel (0) target = $region29
    $region28: #{tpu_custom_call.1} parent=1 // pred_region
      %880 = dma.done [#allocation3], 16
    $region29: #{tpu_custom_call.1} parent=1 // pred_fallthru
      _
    %881 = vsyncpa [#allocation3], 1

</llo_original>
